<compile_context>
chip_gen: v7x
topology: tpu7x:2x2x1
jax: 0.10.0
libtpu: 0.0.40
codegen_flags: <defaults>
</compile_context>

<pallas_src>
import functools

import jax
import jax.numpy as jnp
from jax import lax
from jax.experimental import pallas as pl
from jax.experimental.pallas import tpu as pltpu

LANES = 128            # lane width of the reshaped 2-D view
SUBLANES = 8
MAX_BLOCK_ROWS = 8192  # 8192 x 128 x 4 B = 4 MiB (f32) per input per buffer
CHUNK_ROWS = 512       # in-kernel sub-chunk (bounds live ranges / vreg pressure)
NUM_SHARDS = 2         # matches v7x's 2 TensorCores; harmless on 1-TC v5e/v6e


def _bce_sum_kernel(x_ref, t_ref, out_ref, *, n_elems, block_rows, chunk_rows,
                    total_steps, steps_per_shard):
    """Accumulates per-shard (8, 128) partial sums of BCE-with-logits losses."""
    c = pl.program_id(0)            # accumulator shard ("parallel" axis)
    i = pl.program_id(1)            # streaming step within shard ("arbitrary")
    g = c * steps_per_shard + i     # global block index along the row axis

    # Zero this shard's resident accumulator at its first step.  Runs even for
    # shards that end up with no valid work, so the output is always defined.
    @pl.when(i == 0)
    def _init():
        out_ref[...] = jnp.zeros_like(out_ref)

    nsub = block_rows // chunk_rows                  # static Python int
    block_elems = block_rows * LANES                 # static Python int
    needs_tail_mask = (n_elems % block_elems) != 0   # static Python bool

    def chunk_partial(start, masked):
        """(8,128) partial sum of losses for the sub-chunk at row offset `start`."""
        # Cast to f32 in-kernel (VPU has slack; keeps HBM traffic at native width).
        x = x_ref[pl.ds(start, chunk_rows), :].astype(jnp.float32)
        t = t_ref[pl.ds(start, chunk_rows), :].astype(jnp.float32)
        # Numerically stable BCE with logits: max(x,0) - x*t + log1p(exp(-|x|)).
        loss = jnp.maximum(x, 0.0) - x * t + jnp.log1p(jnp.exp(-jnp.abs(x)))
        if masked:
            # Only the final global block can hold invalid elements (alignment
            # pad and/or stale-VMEM rows of a partial edge block).  jnp.where is
            # a select, so garbage/NaN in masked lanes cannot propagate.
            valid = n_elems - g * block_elems        # scalar, in (0, block_elems]
            row = lax.broadcasted_iota(jnp.int32, (chunk_rows, LANES), 0)
            lane = lax.broadcasted_iota(jnp.int32, (chunk_rows, LANES), 1)
            local = (start + row) * LANES + lane
            loss = jnp.where(local < valid, loss, 0.0)
        # (chunk_rows,128) -> (8,128): pure cross-vreg VPU adds.
        return loss.reshape(chunk_rows // SUBLANES, SUBLANES, LANES).sum(axis=0)

    def block_partial(masked):
        if nsub == 1:
            return chunk_partial(0, masked)
        # Bounded live ranges: never materialize a full (block_rows,128) f32 temp.
        return lax.fori_loop(
            0, nsub,
            lambda s, acc: acc + chunk_partial(
                pl.multiple_of(s * chunk_rows, chunk_rows), masked),
            jnp.zeros((SUBLANES, LANES), jnp.float32),
        )

    @pl.when(g < total_steps)
    def _valid():
        if needs_tail_mask:
            @pl.when(g == total_steps - 1)
            def _tail():
                out_ref[...] += block_partial(True)

            @pl.when(g != total_steps - 1)
            def _body():
                out_ref[...] += block_partial(False)
        else:
            out_ref[...] += block_partial(False)


@jax.jit
def segmentation_loss_bce(output: jax.Array, target: jax.Array) -> jax.Array:
    """Pallas implementation of SegmentationLoss(['bce']).forward(output, target).

    `target` may be passed in any dtype (bf16 / uint8 / f32, ...); it is cast to
    f32 on the VPU inside the kernel, so narrow targets reduce HBM traffic.
    """
    assert output.shape == target.shape
    n_elems = output.size
    x = output.reshape(-1)
    t = target.reshape(-1)          # keep native dtype; cast happens in-kernel

    rows = pl.cdiv(n_elems, LANES)
    if rows <= MAX_BLOCK_ROWS:
        # Single-block case (tensor < ~1M elems): round rows up to a sublane
        # multiple so the in-kernel (rows/8, 8, 128) partial-sum reshape is legal.
        rows = pl.cdiv(rows, SUBLANES) * SUBLANES
        block_rows = rows
    else:
        block_rows = MAX_BLOCK_ROWS

    padded_n = rows * LANES
    pad = padded_n - n_elems
    if pad:
        # Only shapes with n % 128 != 0 (or tiny single-block tensors not a
        # multiple of 1024) pay this copy; typical NCHW image shapes hit pad == 0.
        x = jnp.pad(x, (0, pad))
        t = jnp.pad(t, (0, pad))

    x2 = x.reshape(rows, LANES)
    t2 = t.reshape(rows, LANES)

    chunk_rows = CHUNK_ROWS if block_rows % CHUNK_ROWS == 0 else block_rows
    total_steps = pl.cdiv(rows, block_rows)
    steps_per_shard = pl.cdiv(total_steps, NUM_SHARDS)
    grid = (NUM_SHARDS, steps_per_shard)

    def in_index(c, i):
        # Clamp so shards with fewer real steps still reference a valid block
        # (their contribution is skipped inside the kernel via `g < total_steps`).
        return (jnp.minimum(c * steps_per_shard + i, total_steps - 1), 0)

    in_spec = pl.BlockSpec((block_rows, LANES), in_index)
    out_spec = pl.BlockSpec((SUBLANES, LANES), lambda c, i: (c, 0))

    kernel = functools.partial(
        _bce_sum_kernel,
        n_elems=n_elems,
        block_rows=block_rows,
        chunk_rows=chunk_rows,
        total_steps=total_steps,
        steps_per_shard=steps_per_shard,
    )

    bytes_accessed = (x2.size * x2.dtype.itemsize + t2.size * t2.dtype.itemsize
                      + NUM_SHARDS * SUBLANES * LANES * 4)

    partials = pl.pallas_call(
        kernel,
        out_shape=jax.ShapeDtypeStruct((NUM_SHARDS * SUBLANES, LANES), jnp.float32),
        grid_spec=pltpu.PrefetchScalarGridSpec(
            num_scalar_prefetch=0,
            grid=grid,
            in_specs=[in_spec, in_spec],
            out_specs=out_spec,
        ),
        compiler_params=pltpu.CompilerParams(
            dimension_semantics=("parallel", "arbitrary"),
            vmem_limit_bytes=40 * 1024 * 1024,
        ),
        cost_estimate=pl.CostEstimate(
            flops=7 * n_elems,
            transcendentals=2 * n_elems,
            bytes_accessed=bytes_accessed,
        ),
    )(x2, t2)

    # Final 2048-way partial-sum reduce + mean in the wrapper (tiny XLA op).
    return (jnp.sum(partials) / jnp.float32(n_elems)).astype(jnp.float32)


def _reference_bce(output, target):
    x = output.astype(jnp.float32)
    t = target.astype(jnp.float32)
    loss = jnp.maximum(x, 0.0) - x * t + jnp.log1p(jnp.exp(-jnp.abs(x)))
    return jnp.mean(loss)


if __name__ == "__main__":
    key = jax.random.PRNGKey(0)

    # Primary small case: NCHW logits + binary targets.  Target shipped as bf16
    # (the kernel casts in VMEM, so narrow targets cut that input's HBM traffic).
    k1, k2 = jax.random.split(key)
    output = jax.random.normal(k1, (2, 4, 16, 16), dtype=jnp.float32)
    target = (jax.random.uniform(k2, (2, 4, 16, 16)) > 0.5).astype(jnp.bfloat16)
    loss = jax.block_until_ready(segmentation_loss_bce(output, target))
    ref = _reference_bce(output, target)
    assert jnp.allclose(loss, ref, atol=1e-5, rtol=1e-4), (loss, ref)

    # Ragged shape (element count not a multiple of 128): exercises the
    # in-kernel tail mask and the tiny alignment pad path.
    k3, k4 = jax.random.split(k2)
    out_r = jax.random.normal(k3, (2, 3, 17, 19), dtype=jnp.float32)
    tgt_r = (jax.random.uniform(k4, (2, 3, 17, 19)) > 0.5).astype(jnp.float32)
    loss_r = jax.block_until_ready(segmentation_loss_bce(out_r, tgt_r))
    ref_r = _reference_bce(out_r, tgt_r)
    assert jnp.allclose(loss_r, ref_r, atol=1e-5, rtol=1e-4), (loss_r, ref_r)

    # Multi-block shape: exercises the sharded ("parallel") grid axis, the
    # chunked fori_loop accumulation and the partial (stale-VMEM) last block.
    k5, k6 = jax.random.split(k4)
    out_b = jax.random.normal(k5, (2, 4, 384, 512), dtype=jnp.float32)
    tgt_b = (jax.random.uniform(k6, (2, 4, 384, 512)) > 0.5).astype(jnp.bfloat16)
    loss_b = jax.block_until_ready(segmentation_loss_bce(out_b, tgt_b))
    ref_b = _reference_bce(out_b, tgt_b)
    assert jnp.allclose(loss_b, ref_b, atol=1e-5, rtol=1e-4), (loss_b, ref_b)

    print("KERNEL_OK")
</pallas_src>

<mosaic_0001>
module attributes {stable_mosaic.version = 11 : i64} {
  func.func @_bce_sum_kernel(%arg0: i32, %arg1: i32, %arg2: memref<16x128xf32, #tpu.memory_space<vmem>>, %arg3: memref<16x128xbf16, #tpu.memory_space<vmem>>, %arg4: memref<8x128xf32, #tpu.memory_space<vmem>>) attributes {dimension_semantics = [#tpu.dimension_semantics<parallel>, #tpu.dimension_semantics<arbitrary>], iteration_bounds = array<i64: 2, 1>, scalar_prefetch = 0 : i64, scratch_operands = 0 : i64, tpu.core_type = #tpu.core_type<tc>, window_params = [{transform_indices = @transform_0, window_bounds = array<i64: 16, 128>}, {transform_indices = @transform_1, window_bounds = array<i64: 16, 128>}, {transform_indices = @transform_2, window_bounds = array<i64: 8, 128>}]} {
    %c1_i32 = arith.constant 1 : i32
    %0 = arith.muli %arg0, %c1_i32 : i32
    %1 = arith.addi %0, %arg1 : i32
    %c0_i32 = arith.constant 0 : i32
    %2 = arith.cmpi eq, %arg1, %c0_i32 : i32
    %3 = arith.extui %2 : i1 to i32
    %c0_i32_0 = arith.constant 0 : i32
    %4 = arith.cmpi ne, %3, %c0_i32_0 : i32
    scf.if %4 {
      %cst = arith.constant 0.000000e+00 : f32
      %8 = vector.broadcast %cst : f32 to vector<8x128xf32>
      %c0 = arith.constant 0 : index
      %c0_3 = arith.constant 0 : index
      %9 = vector.load %arg4[%c0, %c0_3] : memref<8x128xf32, #tpu.memory_space<vmem>>, vector<8x128xf32>
      tpu.vector_store %arg4[%c0, %c0_3], %8 {strides = array<i32>} : memref<8x128xf32, #tpu.memory_space<vmem>>, vector<8x128xf32>,
    } else {
    }
    %c1_i32_1 = arith.constant 1 : i32
    %5 = arith.cmpi slt, %1, %c1_i32_1 : i32
    %6 = arith.extui %5 : i1 to i32
    %c0_i32_2 = arith.constant 0 : i32
    %7 = arith.cmpi ne, %6, %c0_i32_2 : i32
    scf.if %7 {
      %c0 = arith.constant 0 : index
      %c0_3 = arith.constant 0 : index
      %8 = vector.load %arg4[%c0, %c0_3] : memref<8x128xf32, #tpu.memory_space<vmem>>, vector<8x128xf32>
      %c0_4 = arith.constant 0 : index
      %c0_5 = arith.constant 0 : index
      %9 = vector.load %arg2[%c0_4, %c0_5] : memref<16x128xf32, #tpu.memory_space<vmem>>, vector<16x128xf32>
      %c0_6 = arith.constant 0 : index
      %c0_7 = arith.constant 0 : index
      %10 = vector.load %arg3[%c0_6, %c0_7] : memref<16x128xbf16, #tpu.memory_space<vmem>>, vector<16x128xbf16>
      %11 = arith.extf %10 : vector<16x128xbf16> to vector<16x128xf32>
      %cst = arith.constant 0.000000e+00 : f32
      %12 = vector.broadcast %cst : f32 to vector<16x128xf32>
      %13 = arith.maximumf %9, %12 : vector<16x128xf32>
      %14 = arith.mulf %9, %11 : vector<16x128xf32>
      %15 = arith.subf %13, %14 : vector<16x128xf32>
      %16 = math.absf %9 : vector<16x128xf32>
      %cst_8 = arith.constant 0.000000e+00 : f32
      %17 = vector.broadcast %cst_8 : f32 to vector<16x128xf32>
      %18 = arith.subf %17, %16 : vector<16x128xf32>
      %19 = math.exp %18 : vector<16x128xf32>
      %20 = math.log1p %19 : vector<16x128xf32>
      %21 = arith.addf %15, %20 : vector<16x128xf32>
      %22 = vector.shape_cast %21 : vector<16x128xf32> to vector<2x8x128xf32>
      %cst_9 = arith.constant dense<0.000000e+00> : vector<8x128xf32>
      %23 = vector.multi_reduction <add>, %22, %cst_9 [0] : vector<2x8x128xf32> to vector<8x128xf32>
      %24 = arith.addf %8, %23 : vector<8x128xf32>
      %c0_10 = arith.constant 0 : index
      %c0_11 = arith.constant 0 : index
      %25 = vector.load %arg4[%c0_10, %c0_11] : memref<8x128xf32, #tpu.memory_space<vmem>>, vector<8x128xf32>
      tpu.vector_store %arg4[%c0_10, %c0_11], %24 {strides = array<i32>} : memref<8x128xf32, #tpu.memory_space<vmem>>, vector<8x128xf32>,
    } else {
    }
    return
  }
  func.func @transform_0(%arg0: i32, %arg1: i32) -> (i32, i32) {
    %c1_i32 = arith.constant 1 : i32
    %0 = arith.muli %arg0, %c1_i32 : i32
    %1 = arith.addi %0, %arg1 : i32
    %c0_i32 = arith.constant 0 : i32
    %2 = arith.minsi %1, %c0_i32 : i32
    %c0_i32_0 = arith.constant 0 : i32
    %c0_i32_1 = arith.constant 0 : i32
    return %2, %c0_i32_0 : i32, i32
  }
  func.func @transform_1(%arg0: i32, %arg1: i32) -> (i32, i32) {
    %c1_i32 = arith.constant 1 : i32
    %0 = arith.muli %arg0, %c1_i32 : i32
    %1 = arith.addi %0, %arg1 : i32
    %c0_i32 = arith.constant 0 : i32
    %2 = arith.minsi %1, %c0_i32 : i32
    %c0_i32_0 = arith.constant 0 : i32
    %c0_i32_1 = arith.constant 0 : i32
    return %2, %c0_i32_0 : i32, i32
  }
  func.func @transform_2(%arg0: i32, %arg1: i32) -> (i32, i32) {
    %c0_i32 = arith.constant 0 : i32
    %c0_i32_0 = arith.constant 0 : i32
    return %arg0, %c0_i32 : i32, i32
  }
}

</mosaic_0001>

<llo_original>
// kernel: segmentation_loss_bce.1
$region0: #{segmentation_loss_bce.1}
  #allocation0 [shape = 'u32[]', space=smem, size = 0x4, offset = 0x4, fixed_abs, tag = 'smem constant byte address 0x4 - core index']
  #allocation1 [shape = 'u32[144,128]{1,0:T(1,128)}', space=vmem, size = 0x12000, scoped, tag = 'internal scratch']
  %s0 = inlined_call_operand.vmem [shape: f32[16,128], index: 0, kind: input, shape index: {}]
  %s1 = inlined_call_operand.vmem [shape: bf16[16,128], index: 1, kind: input, shape index: {}]
  %s2 = inlined_call_operand.vmem [shape: f32[16,128], index: 2, kind: output, shape index: {}]
  %s3 = sld [smem:[#allocation0]]
  $region49: #{segmentation_loss_bce.1} parent=0
    _
  %s5 = ssub.s32 1, %s3
  %s6 = scalar_select 0, %s5, %s3
  loop: start=0, step=1, limit=4
  $region2: #{segmentation_loss_bce.1} parent=0 // loop_pre_header
    _
  $region3: #{segmentation_loss_bce.1} parent=0 // loop_header
    %s8 = sphi 0, %s12
    %p9 = scmp.ge.s32.totalorder %s8, 4
    %s15 = sphi 0, %s27
    %s16 = sphi 0, %s23
    %s17 = sphi 0, %s15
    %s18 = sphi 0, %s16
    %s19 = sphi 0, %s17
    %s20 = sphi 0, %s18
    %s36 = sphi 0, %s38
    %s39 = sphi 0, %s36
    %s40 = sphi 0, %s39
    %s56 = sphi 0, %s40
    %s68 = sphi 0, %s70
    %s71 = sphi 0, %s68
    %s72 = sphi 0, %s71
    %s88 = sphi 0, %s72
    %s94 = sphi 0, %s96
    %s97 = sphi 0, %s94
    %s98 = sphi 0, %s97
    %s114 = sphi 0, %s98
  $region4: #{segmentation_loss_bce.1} parent=0 // loop_header_branch
    %11 = sbr.rel (%p9) target = $region8
  $region5: #{segmentation_loss_bce.1} parent=0 // loop_body
    %s13 = ssub.s32 %s8, 1
    %s14 = ssub.s32 %s8, 2
    %s21 = sadd.s32 1, %s16
    %p22 = scmp.ge.s32.totalorder %s21, 1
    %s23 = scalar_select %p22, 0, %s21
    %s24 = sadd.s32 1, %s15
    %s25 = scalar_select %p22, %s24, %s15
    %p26 = scmp.ge.s32.totalorder %s25, 2
    %s27 = scalar_select %p26, 0, %s25
    %s28 = sadd.s32 %s15, %s16
    %p29 = scmp.lt.s32.totalorder %s28, 0
    %s30 = scalar_select %p29, %s28, 0
    %s31 = sadd.s32 %s27, %s23
    %p32 = scmp.lt.s32.totalorder %s31, 0
    %s33 = scalar_select %p32, %s31, 0
    %s34 = ssub.s32 %s30, %s33
    %p35 = scmp.eq.s32.totalorder %s34, 0
    %s37 = sadd.s32 %s36, 1
    %s38 = scalar_select %p35, %s36, %s37
    %p41 = pneg %p35
    %p42 = scmp.eq.s32.totalorder %s8, 1
    %p43 = por %p41, %p42
    %p44 = scmp.ne.s32.totalorder %s36, %s39
    %p45 = scmp.eq.s32.totalorder %s8, 0
    %p46 = por %p44, %p45
    %p47 = scmp.ne.s32.totalorder %s36, %s39
    %p48 = scmp.eq.s32.totalorder %s13, 1
    %p49 = por %p47, %p48
    %p50 = scmp.ne.s32.totalorder %s39, %s40
    %p51 = scmp.eq.s32.totalorder %s13, 0
    %p52 = por %p50, %p51
    %p53 = scmp.ne.s32.totalorder %s39, %s40
    %p54 = scmp.eq.s32.totalorder %s14, 1
    %p55 = por %p53, %p54
    %p57 = scmp.ne.s32.totalorder %s40, %s56
    %p58 = scmp.eq.s32.totalorder %s14, 0
    %p59 = por %p57, %p58
    %s60 = sadd.s32 %s15, %s16
    %p61 = scmp.lt.s32.totalorder %s60, 0
    %s62 = scalar_select %p61, %s60, 0
    %s63 = sadd.s32 %s27, %s23
    %p64 = scmp.lt.s32.totalorder %s63, 0
    %s65 = scalar_select %p64, %s63, 0
    %s66 = ssub.s32 %s62, %s65
    %p67 = scmp.eq.s32.totalorder %s66, 0
    %s69 = sadd.s32 %s68, 1
    %s70 = scalar_select %p67, %s68, %s69
    %p73 = pneg %p67
    %p74 = scmp.eq.s32.totalorder %s8, 1
    %p75 = por %p73, %p74
    %p76 = scmp.ne.s32.totalorder %s68, %s71
    %p77 = scmp.eq.s32.totalorder %s8, 0
    %p78 = por %p76, %p77
    %p79 = scmp.ne.s32.totalorder %s68, %s71
    %p80 = scmp.eq.s32.totalorder %s13, 1
    %p81 = por %p79, %p80
    %p82 = scmp.ne.s32.totalorder %s71, %s72
    %p83 = scmp.eq.s32.totalorder %s13, 0
    %p84 = por %p82, %p83
    %p85 = scmp.ne.s32.totalorder %s71, %s72
    %p86 = scmp.eq.s32.totalorder %s14, 1
    %p87 = por %p85, %p86
    %p89 = scmp.ne.s32.totalorder %s72, %s88
    %p90 = scmp.eq.s32.totalorder %s14, 0
    %p91 = por %p89, %p90
    %s92 = ssub.s32 %s15, %s27
    %p93 = scmp.eq.s32.totalorder %s92, 0
    %s95 = sadd.s32 %s94, 1
    %s96 = scalar_select %p93, %s94, %s95
    %p99 = pneg %p93
    %p100 = scmp.eq.s32.totalorder %s8, 1
    %p101 = por %p99, %p100
    %p102 = scmp.ne.s32.totalorder %s94, %s97
    %p103 = scmp.eq.s32.totalorder %s8, 0
    %p104 = por %p102, %p103
    %p105 = scmp.ne.s32.totalorder %s94, %s97
    %p106 = scmp.eq.s32.totalorder %s13, 1
    %p107 = por %p105, %p106
    %p108 = scmp.ne.s32.totalorder %s97, %s98
    %p109 = scmp.eq.s32.totalorder %s13, 0
    %p110 = por %p108, %p109
    %p111 = scmp.ne.s32.totalorder %s97, %s98
    %p112 = scmp.eq.s32.totalorder %s14, 1
    %p113 = por %p111, %p112
    %p115 = scmp.ne.s32.totalorder %s98, %s114
    %p116 = scmp.eq.s32.totalorder %s14, 0
    %p117 = por %p115, %p116
    %p118 = scmp.le.s32.totalorder 1, %s8
    %p119 = scmp.lt.s32.totalorder %s8, 3
    %p120 = pnand %p118, %p119
    %p121 = pneg %p120
    // Predicated region
    $region9: #{segmentation_loss_bce.1} parent=5 // pred_check
      _
    $region10: #{segmentation_loss_bce.1} parent=5 // pred_check_branch
      %123 = sbr.rel (%p120) target = $region12
    $region11: #{segmentation_loss_bce.1} parent=5 // pred_region
      %s124 = ssub.s32 %s8, 1
    $region12: #{segmentation_loss_bce.1} parent=5 // pred_fallthru
      _
    %p125 = scmp.lt.s32.totalorder %s8, 2
    // Predicated region
    $region13: #{segmentation_loss_bce.1} parent=5 // pred_check
      %p126 = pneg %p125
    $region14: #{segmentation_loss_bce.1} parent=5 // pred_check_branch
      %128 = sbr.rel (%p126) target = $region16
    $region15: #{segmentation_loss_bce.1} parent=5 // pred_region
      // Predicated region
      $region17: #{segmentation_loss_bce.1} parent=15 // pred_check
        %p129 = pneg %p46
      $region18: #{segmentation_loss_bce.1} parent=15 // pred_check_branch
        %131 = sbr.rel (%p129) target = $region20
      $region19: #{segmentation_loss_bce.1} parent=15 // pred_region
        %s132 = sadd.s32 %s15, %s16
        %p133 = scmp.lt.s32.totalorder %s132, 0
        %s134 = scalar_select %p133, %s132, 0
        %s135 = smul.u32 2, %s134
        %p136 = scmp.lt.s32.totalorder %s135, 1
        %s137 = scalar_select %p136, %s135, 1
        %s138 = smul.addr %s137, 8
        %s139 = scalar_lea.vmem %s0, %s138
        %s140 = sadd.s32 %s15, %s16
        %p141 = scmp.lt.s32.totalorder %s140, 0
        %s142 = scalar_select %p141, %s140, 0
        %s143 = smul.u32 2, %s142
      $region20: #{segmentation_loss_bce.1} parent=15 // pred_fallthru
        _
      // Predicated region
      $region21: #{segmentation_loss_bce.1} parent=15 // pred_check
        %p144 = pneg %p78
      $region22: #{segmentation_loss_bce.1} parent=15 // pred_check_branch
        %146 = sbr.rel (%p144) target = $region24
      $region23: #{segmentation_loss_bce.1} parent=15 // pred_region
        %s147 = sadd.s32 %s15, %s16
        %p148 = scmp.lt.s32.totalorder %s147, 0
        %s149 = scalar_select %p148, %s147, 0
        %s150 = smul.u32 2, %s149
        %p151 = scmp.lt.s32.totalorder %s150, 1
        %s152 = scalar_select %p151, %s150, 1
        %s153 = smul.addr %s152, 4
        %s154 = scalar_lea.vmem %s1, %s153
        %s155 = sadd.s32 %s15, %s16
        %p156 = scmp.lt.s32.totalorder %s155, 0
        %s157 = scalar_select %p156, %s155, 0
        %s158 = smul.u32 2, %s157
      $region24: #{segmentation_loss_bce.1} parent=15 // pred_fallthru
        _
    $region16: #{segmentation_loss_bce.1} parent=5 // pred_fallthru
      _
    %p159 = scmp.le.s32.totalorder 1, %s8
    %p160 = scmp.lt.s32.totalorder %s8, 3
    %p161 = pnand %p159, %p160
    %p162 = pneg %p161
    // Predicated region
    $region25: #{segmentation_loss_bce.1} parent=5 // pred_check
      _
    $region26: #{segmentation_loss_bce.1} parent=5 // pred_check_branch
      %164 = sbr.rel (%p161) target = $region28
    $region27: #{segmentation_loss_bce.1} parent=5 // pred_region
      %s165 = ssub.s32 %s8, 1
      %s166 = sadd.s32 %s17, %s18
      %p167 = scmp.lt.s32.totalorder %s166, 0
      %s168 = scalar_select %p167, %s166, 0
      %s169 = smul.u32 2, %s168
      %p170 = scmp.lt.s32.totalorder %s169, 1
      %s171 = scalar_select %p170, %s169, 1
      %s172 = smul.addr %s171, 8
      %s173 = scalar_lea.vmem %s0, %s172
      %p174 = pneg %p52
      %p175 = pneg %p49
      %s176 = sadd.s32 %s17, %s18
      %p177 = scmp.lt.s32.totalorder %s176, 0
      %s178 = scalar_select %p177, %s176, 0
      %s179 = smul.u32 2, %s178
      %p180 = scmp.lt.s32.totalorder %s179, 1
      %s181 = scalar_select %p180, %s179, 1
      %s182 = smul.addr %s181, 4
      %s183 = scalar_lea.vmem %s1, %s182
      %p184 = pneg %p84
      %p185 = pneg %p81
      %p186 = pneg %p110
      %p187 = pneg %p107
      %p188 = scmp.lt.s32.totalorder %s17, 1
      %s189 = scalar_select %p188, %s17, 1
      %s190 = smul.addr %s189, 8
      %s191 = scalar_lea.vmem %s2, %s190
      %s192 = sadd.s32 %s17, %s18
      %p193 = scmp.lt.s32.totalorder %s192, 0
      %s194 = scalar_select %p193, %s192, 0
      %s195 = smul.u32 2, %s194
      %p196 = scmp.lt.s32.totalorder %s195, 1
      %s197 = scalar_select %p196, %s195, 1
      %s198 = smul.addr %s197, 8
      %s199 = scalar_lea.vmem %s0, %s198
      %s200 = sadd.s32 %s17, %s18
      %p201 = scmp.lt.s32.totalorder %s200, 0
      %s202 = scalar_select %p201, %s200, 0
      %s203 = smul.u32 2, %s202
      %s204 = sadd.s32 %s17, %s18
      %p205 = scmp.lt.s32.totalorder %s204, 0
      %s206 = scalar_select %p205, %s204, 0
      %s207 = smul.u32 2, %s206
      %p208 = scmp.lt.s32.totalorder %s207, 1
      %s209 = scalar_select %p208, %s207, 1
      %s210 = smul.addr %s209, 4
      %s211 = scalar_lea.vmem %s1, %s210
      %s212 = sadd.s32 %s17, %s18
      %p213 = scmp.lt.s32.totalorder %s212, 0
      %s214 = scalar_select %p213, %s212, 0
      %s215 = smul.u32 2, %s214
      %p216 = scmp.lt.s32.totalorder %s17, 1
      %s217 = scalar_select %p216, %s17, 1
      %s218 = smul.addr %s217, 8
      %s219 = scalar_lea.vmem %s2, %s218
      %s220 = sadd.s32 %s17, %s18
      %p221 = scmp.eq.s32.totalorder %s18, 0
      // Predicated region
      $region29: #{segmentation_loss_bce.1} parent=27 // pred_check
        %p222 = pneg %p221
      $region30: #{segmentation_loss_bce.1} parent=27 // pred_check_branch
        %224 = sbr.rel (%p222) target = $region32
      $region31: #{segmentation_loss_bce.1} parent=27 // pred_region
        %225 = vst [vmem:[%s219] sm:$0xff] 0.0
      $region32: #{segmentation_loss_bce.1} parent=27 // pred_fallthru
        _
      %p226 = scmp.lt.s32.totalorder %s220, 1
      // Predicated region
      $region33: #{segmentation_loss_bce.1} parent=27 // pred_check
        %p227 = pneg %p226
      $region34: #{segmentation_loss_bce.1} parent=27 // pred_check_branch
        %229 = sbr.rel (%p227) target = $region36
      $region35: #{segmentation_loss_bce.1} parent=27 // pred_region
        %v230 = vld [vmem:[%s219] sm:$0xff]
        %v231 = vld [vmem:[%s199] sm:$0xff]
        %v232 = vld [vmem:[%s199 + $0x8] sm:$0xff]
        %v233 = vld [vmem:[%s211] sm:$0xf]
        %v234 = vld [vmem:[%s211 + $0x4] sm:$0xf]
        %v235 = vunpack.c.l.bf16 %v233
        %v236 = vunpack.c.l.bf16 %v234
        %v237 = vmax.f32 %v231, 0.0
        %v238 = vmax.f32 %v232, 0.0
        %v239 = vmul.f32 %v231, %v235
        %v240 = vmul.f32 %v232, %v236
        %v241 = vsub.f32 %v237, %v239
        %v242 = vsub.f32 %v238, %v240
        %v243 = vand.u32 2147483647, %v231
        %v244 = vand.u32 2147483647, %v232
        %v245 = vsub.f32 0.0, %v243
        %v246 = vsub.f32 0.0, %v244
        %v247 = vmul.f32 %v245, 1.442695
        %v248 = vpow.pop %v247
        %v249 = vmul.f32 %v246, 1.442695
        %v250 = vpow.pop %v249
        %v251 = vadd.f32 %v248, 1.0
        %v252 = vlog2.pop %v251
        %v253 = vmul.f32 %v252, 0.6931472
        %v254 = vmul.f32 -0.5, %v248
        %v255 = vadd.f32 %v254, 1.0
        %v256 = vmul.f32 %v255, %v248
        %v257 = vand.u32 2147483647, %v248
        %vm258 = vcmp.lt.f32.partialorder %v257, 0.0004427343
        %v259 = vsel %vm258, %v256, %v253
        %v260 = vadd.f32 %v250, 1.0
        %v261 = vlog2.pop %v260
        %v262 = vmul.f32 %v261, 0.6931472
        %v263 = vmul.f32 -0.5, %v250
        %v264 = vadd.f32 %v263, 1.0
        %v265 = vmul.f32 %v264, %v250
        %v266 = vand.u32 2147483647, %v250
        %vm267 = vcmp.lt.f32.partialorder %v266, 0.0004427343
        %v268 = vsel %vm267, %v265, %v262
        %v269 = vadd.f32 %v241, %v259
        %v270 = vadd.f32 %v242, %v268
        %v271 = vadd.f32 %v269, %v270
        %v272 = vadd.f32 %v230, %v271
        %273 = vst [vmem:[%s219] sm:$0xff] %v272
      $region36: #{segmentation_loss_bce.1} parent=27 // pred_fallthru
        _
      %p274 = scmp.lt.s32.totalorder %s17, 1
      %s275 = scalar_select %p274, %s17, 1
      %s276 = smul.addr %s275, 8
      %s277 = scalar_lea.vmem %s2, %s276
      // Predicated region
      $region37: #{segmentation_loss_bce.1} parent=27 // pred_check
        %p278 = pneg %p107
      $region38: #{segmentation_loss_bce.1} parent=27 // pred_check_branch
        %280 = sbr.rel (%p278) target = $region40
      $region39: #{segmentation_loss_bce.1} parent=27 // pred_region
        _
      $region40: #{segmentation_loss_bce.1} parent=27 // pred_fallthru
        _
    $region28: #{segmentation_loss_bce.1} parent=5 // pred_fallthru
      _
    %p281 = scmp.le.s32.totalorder 2, %s8
    // Predicated region
    $region41: #{segmentation_loss_bce.1} parent=5 // pred_check
      %p282 = pneg %p281
    $region42: #{segmentation_loss_bce.1} parent=5 // pred_check_branch
      %284 = sbr.rel (%p282) target = $region44
    $region43: #{segmentation_loss_bce.1} parent=5 // pred_region
      %s285 = ssub.s32 %s8, 2
      // Predicated region
      $region45: #{segmentation_loss_bce.1} parent=43 // pred_check
        %p286 = pneg %p113
      $region46: #{segmentation_loss_bce.1} parent=43 // pred_check_branch
        %288 = sbr.rel (%p286) target = $region48
      $region47: #{segmentation_loss_bce.1} parent=43 // pred_region
        %p289 = scmp.lt.s32.totalorder %s19, 1
        %s290 = scalar_select %p289, %s19, 1
        %s291 = smul.addr %s290, 8
        %s292 = scalar_lea.vmem %s2, %s291
      $region48: #{segmentation_loss_bce.1} parent=43 // pred_fallthru
        _
    $region44: #{segmentation_loss_bce.1} parent=5 // pred_fallthru
      _
  $region6: #{segmentation_loss_bce.1} parent=0 // loop_footer
    %s12 = sadd.s32 1, %s8
  $region7: #{segmentation_loss_bce.1} parent=0 // loop_footer_branch
    %7 = sbr.rel target = $region3
  $region8: #{segmentation_loss_bce.1} parent=0 // loop_exit
    _

</llo_original>
